<compile_context>
chip_gen: v5e
topology: v5e:2x2
jax: 0.10.0
libtpu: 0.0.40
codegen_flags: <defaults>
</compile_context>

<pallas_src>
import functools

import jax
import jax.numpy as jnp
from jax import lax
from jax.experimental import pallas as pl
from jax.experimental.pallas import tpu as pltpu


# Whole-array-in-VMEM spec: no grid, no index_map, no pipelining machinery.
_VMEM_SPEC = pl.BlockSpec(memory_space=pltpu.MemorySpace.VMEM)


def _check_vmem_working_set(*arrays):
    """Gridless whole-array blocks are only sane while everything is tiny.

    Revisit (add a 1-D 'parallel' grid over the batch axis, which also enables
    v7x megacore sharding) only if this grows ~100x.  Well under even v7x's
    64 MiB per-TC VMEM today.
    """
    total = sum(int(a.size) * a.dtype.itemsize for a in arrays)
    assert total < (2 << 20), (
        f"working set {total} B too large for gridless whole-array VMEM blocks"
    )


# ----------------------------------------------------------------------------
# Kernel 1: single MLP evaluation, lane-dense (batch on the lane axis).
# ----------------------------------------------------------------------------
def _state_mlp_kernel_T(yT_ref, w1T_ref, b1T_ref, w2T_ref, b2T_ref, oT_ref):
    # yT: (D, M)  w1T: (H, D)  b1T: (H, 1)  w2T: (D, H)  b2T: (D, 1)
    # Layer 1: (H, D) @ (D, M) + (H, 1) -> tanh      (MXU + VPU add + EUP tanh)
    hT = jnp.tanh(
        jnp.dot(w1T_ref[...], yT_ref[...], preferred_element_type=jnp.float32)
        + b1T_ref[...]
    )
    # Layer 2: (D, H) @ (H, M) + (D, 1) — lane dim M is a multiple of 128, so
    # the output store is unmasked.
    oT_ref[...] = (
        jnp.dot(w2T_ref[...], hT, preferred_element_type=jnp.float32) + b2T_ref[...]
    ).astype(oT_ref.dtype)


def _state_mlp_pallas_T(yT, w1T, b1T, w2T, b2T):
    """One gridless pallas_call on the transposed (lane-dense) problem."""
    D, M = yT.shape
    H = w1T.shape[0]
    _check_vmem_working_set(yT, w1T, b1T, w2T, b2T)
    itemsize = 4
    ce = pl.CostEstimate(
        flops=4 * M * D * H,
        transcendentals=M * H,
        bytes_accessed=itemsize * (2 * D * M + H * D + H + D * H + D),
    )
    return pl.pallas_call(
        _state_mlp_kernel_T,
        out_shape=jax.ShapeDtypeStruct((D, M), yT.dtype),
        in_specs=[_VMEM_SPEC] * 5,
        out_specs=_VMEM_SPEC,
        cost_estimate=ce,
    )(yT, w1T, b1T, w2T, b2T)


# ----------------------------------------------------------------------------
# Kernel 2: full RK4 time-stepping loop fused into ONE pallas_call.
# Weights stay resident in VMEM across all 4*n_steps MLP evaluations.
# ----------------------------------------------------------------------------
def _rk4_kernel_T(yT_ref, w1T_ref, b1T_ref, w2T_ref, b2T_ref, oT_ref, *, dt, n_steps):
    w1T = w1T_ref[...]
    w2T = w2T_ref[...]
    D, M = yT_ref.shape
    H = w1T.shape[0]

    # Hoist bias broadcasts out of the loop body (JAX does not CSE
    # broadcast_in_dim; without this each iteration pays a fresh VPU broadcast).
    b1_b = jnp.broadcast_to(b1T_ref[...], (H, M))
    b2_b = jnp.broadcast_to(b2T_ref[...], (D, M))

    def f(yT):
        # diffeq(t, y) = module(y): autonomous, t does not enter the RHS.
        hT = jnp.tanh(jnp.dot(w1T, yT, preferred_element_type=jnp.float32) + b1_b)
        return jnp.dot(w2T, hT, preferred_element_type=jnp.float32) + b2_b

    half_dt = jnp.float32(0.5 * dt)
    dt_f = jnp.float32(dt)
    sixth_dt = jnp.float32(dt / 6.0)

    def step(_, yT):
        # RK4 stages are sequentially data-dependent -> looped, not batched.
        k1 = f(yT)
        k2 = f(yT + half_dt * k1)
        k3 = f(yT + half_dt * k2)
        k4 = f(yT + dt_f * k3)
        return yT + sixth_dt * (k1 + 2.0 * k2 + 2.0 * k3 + k4)

    yT = yT_ref[...].astype(jnp.float32)
    yT = lax.fori_loop(0, n_steps, step, yT, unroll=(n_steps <= 8))
    oT_ref[...] = yT.astype(oT_ref.dtype)


def rk4_integrate_pallas(y, params, *, dt, n_steps):
    """Integrates dy/dt = module(y) with classic RK4 for n_steps steps of size
    dt, entirely inside one Pallas kernel (weights DMA'd to VMEM once, only the
    initial state in and the final state out)."""
    w1, b1, w2, b2 = params
    M, D = y.shape
    H = w1.shape[1]
    # Layout plumbing only: put the batch axis on lanes.
    yT, w1T, b1T, w2T, b2T = y.T, w1.T, b1.T, w2.T, b2.T
    _check_vmem_working_set(yT, w1T, b1T, w2T, b2T)
    itemsize = 4
    ce = pl.CostEstimate(
        flops=n_steps * 4 * (4 * M * D * H + 8 * M * D),
        transcendentals=n_steps * 4 * M * H,
        bytes_accessed=itemsize * (2 * D * M + H * D + H + D * H + D),
    )
    kernel = functools.partial(_rk4_kernel_T, dt=float(dt), n_steps=int(n_steps))
    outT = pl.pallas_call(
        kernel,
        out_shape=jax.ShapeDtypeStruct((D, M), y.dtype),
        in_specs=[_VMEM_SPEC] * 5,
        out_specs=_VMEM_SPEC,
        cost_estimate=ce,
    )(yT, w1T, b1T, w2T, b2T)
    return outT.T


# ----------------------------------------------------------------------------
# DiffEqWrapper entry points.
# ----------------------------------------------------------------------------
def diffeq_wrapper_forward(t, y, params):
    """DiffEqWrapper.forward(t, y): the wrapped module takes only y, so t is
    ignored (the 1-parameter branch of DiffEqWrapper.__init__)."""
    del t  # diffeq = lambda t, y: module(y)
    w1, b1, w2, b2 = params
    # Layout plumbing: transpose so batch is the lane (last) dim in-kernel.
    outT = _state_mlp_pallas_T(y.T, w1.T, b1.T, w2.T, b2.T)
    return outT.T


def diffeq_wrapper_forward_multi(t_stack, y_stack, params):
    """Fused variant for INDEPENDENT states only (multiple trajectories,
    parallel-in-time nodes, post-hoc dense-output evaluations): evaluates
    module(y) for a stack (S, B, D) in a single pallas_call, weights DMA'd
    once and the (S*B)-wide batch on the lane axis.

    NOTE: RK stages are sequentially data-dependent and must NOT be batched
    here — use rk4_integrate_pallas for the stepping loop instead.
    """
    del t_stack  # t ignored by the 1-arg wrapped module
    w1, b1, w2, b2 = params
    S, B, D = y_stack.shape
    outT = _state_mlp_pallas_T(y_stack.reshape(S * B, D).T, w1.T, b1.T, w2.T, b2.T)
    return outT.T.reshape(S, B, D)


# ----------------------------------------------------------------------------
# Pure-JAX references.
# ----------------------------------------------------------------------------
def _reference_forward(t, y, params):
    del t
    w1, b1, w2, b2 = params
    h = jnp.tanh(y.astype(jnp.float32) @ w1 + b1)
    return (h @ w2 + b2).astype(y.dtype)


def _reference_rk4(y, params, *, dt, n_steps):
    def f(yy):
        return _reference_forward(None, yy, params)

    yy = y.astype(jnp.float32)
    for _ in range(n_steps):
        k1 = f(yy)
        k2 = f(yy + 0.5 * dt * k1)
        k3 = f(yy + 0.5 * dt * k2)
        k4 = f(yy + dt * k3)
        yy = yy + (dt / 6.0) * (k1 + 2.0 * k2 + 2.0 * k3 + k4)
    return yy.astype(y.dtype)


if __name__ == "__main__":
    # Small shapes consistent with an ODE state MLP.  Batch = 128 so the lane
    # axis of the transposed problem is exactly one full 128-lane vreg row.
    batch, dim, hidden = 128, 32, 64
    n_states = 4          # independent states for the fused multi-eval path
    n_steps, dt = 8, 0.05  # fused in-kernel RK4 integration

    key = jax.random.PRNGKey(0)
    k_y, k_ys, k_w1, k_b1, k_w2, k_b2 = jax.random.split(key, 6)

    y = jax.random.normal(k_y, (batch, dim), dtype=jnp.float32)
    y_stack = jax.random.normal(k_ys, (n_states, batch, dim), dtype=jnp.float32)
    t = jnp.float32(0.5)  # unused by the 1-arg state MLP
    t_stack = jnp.linspace(0.0, 1.0, n_states, dtype=jnp.float32)

    # Deterministic synthetic parameters (shapes from the MLP's __init__).
    w1 = jax.random.normal(k_w1, (dim, hidden), dtype=jnp.float32) * 0.1
    b1 = jax.random.normal(k_b1, (1, hidden), dtype=jnp.float32) * 0.1
    w2 = jax.random.normal(k_w2, (hidden, dim), dtype=jnp.float32) * 0.1
    b2 = jax.random.normal(k_b2, (1, dim), dtype=jnp.float32) * 0.1
    params = (w1, b1, w2, b2)

    # 1) Plain DiffEqWrapper.forward(t, y) — exact module semantics,
    #    lane-dense single-launch kernel.
    out = jax.block_until_ready(diffeq_wrapper_forward(t, y, params))
    ref = _reference_forward(t, y, params)
    assert out.shape == (batch, dim)
    assert out.dtype == y.dtype
    assert jnp.allclose(out, ref, atol=1e-5, rtol=1e-5)

    # 2) Fused evaluation over INDEPENDENT states: one launch, weights DMA'd
    #    once, 512-wide lane axis.
    out_multi = jax.block_until_ready(
        diffeq_wrapper_forward_multi(t_stack, y_stack, params)
    )
    ref_multi = jnp.stack(
        [_reference_forward(t_stack[s], y_stack[s], params) for s in range(n_states)]
    )
    assert out_multi.shape == (n_states, batch, dim)
    assert jnp.allclose(out_multi, ref_multi, atol=1e-5, rtol=1e-5)

    # 3) Whole RK4 time-stepping loop fused into ONE pallas_call (the headline
    #    perf change: 4*n_steps MLP evals, zero extra launches / weight DMAs).
    out_rk4 = jax.block_until_ready(
        rk4_integrate_pallas(y, params, dt=dt, n_steps=n_steps)
    )
    ref_rk4 = _reference_rk4(y, params, dt=dt, n_steps=n_steps)
    assert out_rk4.shape == (batch, dim)
    assert jnp.allclose(out_rk4, ref_rk4, atol=1e-4, rtol=1e-4)

    print("KERNEL_OK")
</pallas_src>

<mosaic_0001>
module attributes {stable_mosaic.version = 11 : i64} {
  func.func @_state_mlp_kernel_T(%arg0: memref<32x128xf32, #tpu.memory_space<vmem>>, %arg1: memref<64x32xf32, #tpu.memory_space<vmem>>, %arg2: memref<64x1xf32, #tpu.memory_space<vmem>>, %arg3: memref<32x64xf32, #tpu.memory_space<vmem>>, %arg4: memref<32x1xf32, #tpu.memory_space<vmem>>, %arg5: memref<32x128xf32, #tpu.memory_space<vmem>>) attributes {dimension_semantics = [], scalar_prefetch = 0 : i64, scratch_operands = 0 : i64, tpu.core_type = #tpu.core_type<tc>} {
    %c0 = arith.constant 0 : index
    %c0_0 = arith.constant 0 : index
    %0 = vector.load %arg1[%c0, %c0_0] : memref<64x32xf32, #tpu.memory_space<vmem>>, vector<64x32xf32>
    %c0_1 = arith.constant 0 : index
    %c0_2 = arith.constant 0 : index
    %1 = vector.load %arg0[%c0_1, %c0_2] : memref<32x128xf32, #tpu.memory_space<vmem>>, vector<32x128xf32>
    %cst = arith.constant dense<0.000000e+00> : vector<64x128xf32>
    %2 = tpu.matmul %0, %1, %cst {dimension_numbers = #tpu.dot_dimension_numbers<[1], [0], [0], [1], [0, 0, 1, 1], [], []>} : vector<64x32xf32>, vector<32x128xf32>, vector<64x128xf32> -> vector<64x128xf32>
    %c0_3 = arith.constant 0 : index
    %c0_4 = arith.constant 0 : index
    %3 = vector.load %arg2[%c0_3, %c0_4] : memref<64x1xf32, #tpu.memory_space<vmem>>, vector<64x1xf32>
    %4 = vector.broadcast %3 : vector<64x1xf32> to vector<64x128xf32>
    %5 = arith.addf %2, %4 : vector<64x128xf32>
    %6 = math.tanh %5 : vector<64x128xf32>
    %c0_5 = arith.constant 0 : index
    %c0_6 = arith.constant 0 : index
    %7 = vector.load %arg3[%c0_5, %c0_6] : memref<32x64xf32, #tpu.memory_space<vmem>>, vector<32x64xf32>
    %cst_7 = arith.constant dense<0.000000e+00> : vector<32x128xf32>
    %8 = tpu.matmul %7, %6, %cst_7 {dimension_numbers = #tpu.dot_dimension_numbers<[1], [0], [0], [1], [0, 0, 1, 1], [], []>} : vector<32x64xf32>, vector<64x128xf32>, vector<32x128xf32> -> vector<32x128xf32>
    %c0_8 = arith.constant 0 : index
    %c0_9 = arith.constant 0 : index
    %9 = vector.load %arg4[%c0_8, %c0_9] : memref<32x1xf32, #tpu.memory_space<vmem>>, vector<32x1xf32>
    %10 = vector.broadcast %9 : vector<32x1xf32> to vector<32x128xf32>
    %11 = arith.addf %8, %10 : vector<32x128xf32>
    %c0_10 = arith.constant 0 : index
    %c0_11 = arith.constant 0 : index
    %12 = vector.load %arg5[%c0_10, %c0_11] : memref<32x128xf32, #tpu.memory_space<vmem>>, vector<32x128xf32>
    tpu.vector_store %arg5[%c0_10, %c0_11], %11 {strides = array<i32>} : memref<32x128xf32, #tpu.memory_space<vmem>>, vector<32x128xf32>,
    return
  }
}

</mosaic_0001>

<llo_original>
// kernel: tpu_custom_call.1
$region0: #{tpu_custom_call.1}
  #allocation0 [shape = 'u32[]', space=smem, size = 0x4, offset = 0x4, fixed_abs, tag = 'smem constant byte address 0x4 - core index']
  #allocation1 [shape = 'u32[72,128]{1,0:T(1,128)}', space=vmem, size = 0x9000, scoped, tag = 'internal scratch']
  %s0 = inlined_call_operand.vmem [shape: f32[32,128], index: 0, kind: input, shape index: {}]
  %s1 = inlined_call_operand.vmem [shape: f32[64,32], index: 1, kind: input, shape index: {}]
  %s2 = inlined_call_operand.vmem [shape: f32[64,1], index: 2, kind: input, shape index: {}]
  %s3 = inlined_call_operand.vmem [shape: f32[32,64], index: 3, kind: input, shape index: {}]
  %s4 = inlined_call_operand.vmem [shape: f32[32,1], index: 4, kind: input, shape index: {}]
  %s5 = inlined_call_operand.hbm [shape: f32[32,128], index: 5, kind: output, shape index: {}]
  %s6 = sld [smem:[#allocation0]]
  $region30: #{tpu_custom_call.1} parent=0
    _
  %s8 = ssub.s32 1, %s6
  %s9 = scalar_select 0, %s8, %s6
  $region1: #{tpu_custom_call.1} parent=0
    #allocation2 [shape = 'u8[16384]{0}', space=vmem, size = 0x4000, scoped, tag = 'output window, operand 0, single buffered']
    #allocation3 [shape = 's32[1]{0}', space=sflag, size = 0x4, scoped, tag = 'scoped memory for tpu_custom_call.1']
    %10 = vsyncpa [#allocation3], 0
    // Predicated region
    $region2: #{tpu_custom_call.1} parent=1 // pred_check
      _
    $region3: #{tpu_custom_call.1} parent=1 // pred_check_branch
      %12 = sbr.rel (0) target = $region5
    $region4: #{tpu_custom_call.1} parent=1 // pred_region
      _
    $region5: #{tpu_custom_call.1} parent=1 // pred_fallthru
      _
    // Predicated region
    $region6: #{tpu_custom_call.1} parent=1 // pred_check
      _
    $region7: #{tpu_custom_call.1} parent=1 // pred_check_branch
      %14 = sbr.rel (0) target = $region9
    $region8: #{tpu_custom_call.1} parent=1 // pred_region
      _
    $region9: #{tpu_custom_call.1} parent=1 // pred_fallthru
      _
    // Predicated region
    $region10: #{tpu_custom_call.1} parent=1 // pred_check
      _
    $region11: #{tpu_custom_call.1} parent=1 // pred_check_branch
      %16 = sbr.rel (0) target = $region13
    $region12: #{tpu_custom_call.1} parent=1 // pred_region
      _
    $region13: #{tpu_custom_call.1} parent=1 // pred_fallthru
      _
    // Predicated region
    $region14: #{tpu_custom_call.1} parent=1 // pred_check
      _
    $region15: #{tpu_custom_call.1} parent=1 // pred_check_branch
      %18 = sbr.rel (0) target = $region17
    $region16: #{tpu_custom_call.1} parent=1 // pred_region
      _
    $region17: #{tpu_custom_call.1} parent=1 // pred_fallthru
      _
    // Predicated region
    $region18: #{tpu_custom_call.1} parent=1 // pred_check
      _
    $region19: #{tpu_custom_call.1} parent=1 // pred_check_branch
      %20 = sbr.rel (0) target = $region21
    $region20: #{tpu_custom_call.1} parent=1 // pred_region
      _
    $region21: #{tpu_custom_call.1} parent=1 // pred_fallthru
      _
    %v21 = vld [vmem:[%s1] sm:$0xff]
    %v22 = vld [vmem:[%s1 + $0x8] sm:$0xff]
    %v23 = vld [vmem:[%s1 + $0x10] sm:$0xff]
    %v24 = vld [vmem:[%s1 + $0x18] sm:$0xff]
    %v25 = vld [vmem:[%s1 + $0x20] sm:$0xff]
    %v26 = vld [vmem:[%s1 + $0x28] sm:$0xff]
    %v27 = vld [vmem:[%s1 + $0x30] sm:$0xff]
    %v28 = vld [vmem:[%s1 + $0x38] sm:$0xff]
    %v29 = vld [vmem:[%s0] sm:$0xff]
    %v30 = vld [vmem:[%s0 + $0x8] sm:$0xff]
    %v31 = vld [vmem:[%s0 + $0x10] sm:$0xff]
    %v32 = vld [vmem:[%s0 + $0x18] sm:$0xff]
    %v33 = vld [vmem:[%s2] sm:$0xff]
    %v34 = vld [vmem:[%s2 + $0x8] sm:$0xff]
    %v35 = vld [vmem:[%s2 + $0x10] sm:$0xff]
    %v36 = vld [vmem:[%s2 + $0x18] sm:$0xff]
    %v37 = vld [vmem:[%s2 + $0x20] sm:$0xff]
    %v38 = vld [vmem:[%s2 + $0x28] sm:$0xff]
    %v39 = vld [vmem:[%s2 + $0x30] sm:$0xff]
    %v40 = vld [vmem:[%s2 + $0x38] sm:$0xff]
    %42 = vset.pattern.permute.xlu0 0
    %43 = vperm.xlu0 %42, %v33
    %v44 = vpop.permute.xlu0 %43
    %47 = vset.pattern.permute.xlu0 0
    %48 = vperm.xlu0 %47, %v34
    %v49 = vpop.permute.xlu0 %48
    %52 = vset.pattern.permute.xlu0 0
    %53 = vperm.xlu0 %52, %v35
    %v54 = vpop.permute.xlu0 %53
    %57 = vset.pattern.permute.xlu0 0
    %58 = vperm.xlu0 %57, %v36
    %v59 = vpop.permute.xlu0 %58
    %62 = vset.pattern.permute.xlu0 0
    %63 = vperm.xlu0 %62, %v37
    %v64 = vpop.permute.xlu0 %63
    %67 = vset.pattern.permute.xlu0 0
    %68 = vperm.xlu0 %67, %v38
    %v69 = vpop.permute.xlu0 %68
    %72 = vset.pattern.permute.xlu0 0
    %73 = vperm.xlu0 %72, %v39
    %v74 = vpop.permute.xlu0 %73
    %77 = vset.pattern.permute.xlu0 0
    %78 = vperm.xlu0 %77, %v40
    %v79 = vpop.permute.xlu0 %78
    %vm81 = vcmask 261120
    %v83 = vsel %vm81, %v21, 0
    %v86 = vsel %vm81, %v22, 0
    %v89 = vsel %vm81, %v23, 0
    %v92 = vsel %vm81, %v24, 0
    %v95 = vsel %vm81, %v25, 0
    %v98 = vsel %vm81, %v26, 0
    %v101 = vsel %vm81, %v27, 0
    %v104 = vsel %vm81, %v28, 0
    %106 = vmatpush.msra.mxu0 0.0
    %107 = vmatpush.msra.mxu0 0.0
    %108 = vmatpush.msra.mxu0 0.0
    %109 = vmatpush.msra.mxu0 0.0
    %110 = vmatpush.msra.mxu0 0.0
    %111 = vmatpush.msra.mxu0 0.0
    %112 = vmatpush.msra.mxu0 0.0
    %113 = vmatpush.msra.mxu0 0.0
    %114 = vmatpush.msra.mxu0 0.0
    %115 = vmatpush.msra.mxu0 0.0
    %116 = vmatpush.msra.mxu0 0.0
    %117 = vmatpush.msra.mxu0 0.0
    %118 = vmatpush.msra.mxu0 %v32
    %119 = vmatpush.msra.mxu0 %v31
    %120 = vmatpush.msra.mxu0 %v30
    %121 = vmatpush.msra.mxu0 %v29
    %122 = vmatmul.f32.gmra.mxu0 %v83
    %v123 = vpop.f32.mrf.mxu0
    %v124 = vadd.f32 %v44, %v123
    %125 = vmatmul.f32.gmra.mxu0 %v86
    %v126 = vpop.f32.mrf.mxu0
    %v127 = vadd.f32 %v49, %v126
    %128 = vmatmul.f32.gmra.mxu0 %v89
    %v129 = vpop.f32.mrf.mxu0
    %v130 = vadd.f32 %v54, %v129
    %131 = vmatmul.f32.gmra.mxu0 %v92
    %v132 = vpop.f32.mrf.mxu0
    %v133 = vadd.f32 %v59, %v132
    %134 = vmatmul.f32.gmra.mxu0 %v95
    %v135 = vpop.f32.mrf.mxu0
    %v136 = vadd.f32 %v64, %v135
    %137 = vmatmul.f32.gmra.mxu0 %v98
    %v138 = vpop.f32.mrf.mxu0
    %v139 = vadd.f32 %v69, %v138
    %140 = vmatmul.f32.gmra.mxu0 %v101
    %v141 = vpop.f32.mrf.mxu0
    %v142 = vadd.f32 %v74, %v141
    %143 = vmatmul.f32.gmra.mxu0 %v104
    %v144 = vpop.f32.mrf.mxu0
    %v145 = vadd.f32 %v79, %v144
    %146 = vdwg.mxu0
    %v147 = vtanh.pop %v124
    %v148 = vtanh.pop %v127
    %v149 = vtanh.pop %v130
    %v150 = vtanh.pop %v133
    %v151 = vtanh.pop %v136
    %v152 = vtanh.pop %v139
    %v153 = vtanh.pop %v142
    %v154 = vtanh.pop %v145
    %v155 = vld [vmem:[%s3] sm:$0xff]
    %v156 = vld [vmem:[%s3 + $0x8] sm:$0xff]
    %v157 = vld [vmem:[%s3 + $0x10] sm:$0xff]
    %v158 = vld [vmem:[%s3 + $0x18] sm:$0xff]
    %v159 = vld [vmem:[%s4] sm:$0xff]
    %v160 = vld [vmem:[%s4 + $0x8] sm:$0xff]
    %v161 = vld [vmem:[%s4 + $0x10] sm:$0xff]
    %v162 = vld [vmem:[%s4 + $0x18] sm:$0xff]
    %164 = vset.pattern.permute.xlu0 0
    %165 = vperm.xlu0 %164, %v159
    %v166 = vpop.permute.xlu0 %165
    %169 = vset.pattern.permute.xlu0 0
    %170 = vperm.xlu0 %169, %v160
    %v171 = vpop.permute.xlu0 %170
    %174 = vset.pattern.permute.xlu0 0
    %175 = vperm.xlu0 %174, %v161
    %v176 = vpop.permute.xlu0 %175
    %179 = vset.pattern.permute.xlu0 0
    %180 = vperm.xlu0 %179, %v162
    %v181 = vpop.permute.xlu0 %180
    %vm183 = vcmask 523264
    %v185 = vsel %vm183, %v155, 0
    %v188 = vsel %vm183, %v156, 0
    %v191 = vsel %vm183, %v157, 0
    %v194 = vsel %vm183, %v158, 0
    %196 = vmatpush.msra.mxu0 0.0
    %197 = vmatpush.msra.mxu0 0.0
    %198 = vmatpush.msra.mxu0 0.0
    %199 = vmatpush.msra.mxu0 0.0
    %200 = vmatpush.msra.mxu0 0.0
    %201 = vmatpush.msra.mxu0 0.0
    %202 = vmatpush.msra.mxu0 0.0
    %203 = vmatpush.msra.mxu0 0.0
    %204 = vmatpush.msra.mxu0 %v154
    %205 = vmatpush.msra.mxu0 %v153
    %206 = vmatpush.msra.mxu0 %v152
    %207 = vmatpush.msra.mxu0 %v151
    %208 = vmatpush.msra.mxu0 %v150
    %209 = vmatpush.msra.mxu0 %v149
    %210 = vmatpush.msra.mxu0 %v148
    %211 = vmatpush.msra.mxu0 %v147
    %212 = vmatmul.f32.gmra.mxu0 %v185
    %v213 = vpop.f32.mrf.mxu0
    %v214 = vadd.f32 %v166, %v213
    %215 = vmatmul.f32.gmra.mxu0 %v188
    %v216 = vpop.f32.mrf.mxu0
    %v217 = vadd.f32 %v171, %v216
    %218 = vmatmul.f32.gmra.mxu0 %v191
    %v219 = vpop.f32.mrf.mxu0
    %v220 = vadd.f32 %v176, %v219
    %221 = vmatmul.f32.gmra.mxu0 %v194
    %v222 = vpop.f32.mrf.mxu0
    %v223 = vadd.f32 %v181, %v222
    %224 = vdwg.mxu0
    %225 = vst [vmem:[#allocation2] sm:$0xff] %v214
    %226 = vst [vmem:[#allocation2 + $0x8] sm:$0xff] %v217
    %227 = vst [vmem:[#allocation2 + $0x10] sm:$0xff] %v220
    %228 = vst [vmem:[#allocation2 + $0x18] sm:$0xff] %v223
    // Predicated region
    $region22: #{tpu_custom_call.1} parent=1 // pred_check
      _
    $region23: #{tpu_custom_call.1} parent=1 // pred_check_branch
      %230 = sbr.rel (0) target = $region25
    $region24: #{tpu_custom_call.1} parent=1 // pred_region
      %232 = vsyncadd [#allocation3], 0
      %s233 = sshll.u32 [#allocation2], 4
      %s234 = int_to_ptr.vmem [resolvable:$true] %s233
      %s235 = sshll.u32 %s5, 4
      %s236 = int_to_ptr.hbm [resolvable:$true] %s235
      %241 = dma.vmem_to_hbm [thread:$0]  %s234, 512, %s236, [#allocation3], 128, 128, 8
    $region25: #{tpu_custom_call.1} parent=1 // pred_fallthru
      _
    // Predicated region
    $region26: #{tpu_custom_call.1} parent=1 // pred_check
      _
    $region27: #{tpu_custom_call.1} parent=1 // pred_check_branch
      %243 = sbr.rel (0) target = $region29
    $region28: #{tpu_custom_call.1} parent=1 // pred_region
      %245 = dma.done [#allocation3], 512
    $region29: #{tpu_custom_call.1} parent=1 // pred_fallthru
      _
    %246 = vsyncpa [#allocation3], 1

</llo_original>
